<compile_context>
chip_gen: v6e
topology: v6e:2x2x1
jax: 0.10.0
libtpu: 0.0.40
codegen_flags: <defaults>
</compile_context>

<pallas_src>
import functools

import jax
import jax.numpy as jnp
from jax.experimental import pallas as pl
from jax.experimental.pallas import tpu as pltpu

LANE = 128
SUBLANE = 8
_TARGET_BLOCK_BYTES = 2 * 1024 * 1024  # ~2 MB per activation block


def _round_up(x, m):
    return (x + m - 1) // m * m


def _divisor_tile(total, max_tile, quantum):
    """Largest multiple of `quantum` <= max_tile dividing `total`; falls back to `total`."""
    if total <= max_tile:
        return total
    t = (max_tile // quantum) * quantum
    while t >= quantum:
        if total % t == 0:
            return t
        t -= quantum
    return total


# ---------------------------------------------------------------------------
# Pass 1: squeeze (global average pool numerator); HW is the reduction axis.
# ---------------------------------------------------------------------------
def _squeeze_kernel(x_ref, sum_ref, acc_ref, *, hw, hw_tile, needs_mask):
    # x_ref:   (b_blk, C, hw_tile)  native dtype
    # sum_ref: (b_blk, C, 1)        f32 per-channel spatial sums
    # acc_ref: (b_blk, C, 1)        f32 accumulator (persists across hw tiles)
    h = pl.program_id(1)

    @pl.when(h == 0)
    def _():
        acc_ref[...] = jnp.zeros_like(acc_ref)

    xv = x_ref[...].astype(jnp.float32)
    if needs_mask:
        # Boundary tile: positions >= true HW contain undefined data -> zero them.
        lane = jax.lax.broadcasted_iota(jnp.int32, xv.shape, 2)
        xv = jnp.where(h * hw_tile + lane < hw, xv, 0.0)
    acc_ref[...] += jnp.sum(xv, axis=-1, keepdims=True)

    @pl.when(h == pl.num_programs(1) - 1)
    def _():
        sum_ref[...] = acc_ref[...]


# ---------------------------------------------------------------------------
# Pass 2: excite MLP, batched over all B rows in one tiny kernel.
# ---------------------------------------------------------------------------
def _gate_kernel(sum_ref, w1_ref, w2_ref, s_ref, *, inv_hw):
    # sum_ref: (B, C) f32 channel sums; w1_ref: (C, hid); w2_ref: (hid, C)
    # s_ref:   (B, C) gate in the activation dtype
    y = sum_ref[...] * inv_hw  # means (divide by TRUE H*W)
    h = jnp.dot(y, w1_ref[...].astype(jnp.float32),
                preferred_element_type=jnp.float32)
    h = jnp.maximum(h, 0.0)
    s = jnp.dot(h, w2_ref[...].astype(jnp.float32),
                preferred_element_type=jnp.float32)
    s_ref[...] = jax.nn.sigmoid(s).astype(s_ref.dtype)


# ---------------------------------------------------------------------------
# Pass 3: scale — x * gate, broadcast over spatial lanes, native dtype.
# ---------------------------------------------------------------------------
def _scale_kernel(x_ref, s_ref, o_ref):
    # x_ref: (b_blk, c_blk, hw_tile), s_ref: (b_blk, c_blk, 1)
    o_ref[...] = x_ref[...] * s_ref[...]


def se_layer(x, w1, w2):
    """SE forward. x: (B, C, H, W) NCHW. w1: fc1.weight (C//r, C). w2: fc2.weight (C, C//r)."""
    B, C, H, W = x.shape
    HW = H * W
    itemsize = jnp.dtype(x.dtype).itemsize

    # Lane-dense spatial tiling: multiple of 128 lanes, prefer 512.
    hw_tile = 512 if HW >= 512 else _round_up(HW, LANE)
    n_hw = (HW + hw_tile - 1) // hw_tile
    needs_mask = (HW % hw_tile) != 0

    x_flat = x.reshape(B, C, HW)  # metadata-only reshape

    # ---- pass 1: squeeze (full C per block; pack batch rows to ~2 MB blocks).
    bs_tile = max(1, _TARGET_BLOCK_BYTES // max(1, C * hw_tile * itemsize))
    bs_tile = _divisor_tile(B, min(B, bs_tile), 1)
    sums = pl.pallas_call(
        functools.partial(_squeeze_kernel, hw=HW, hw_tile=hw_tile,
                          needs_mask=needs_mask),
        out_shape=jax.ShapeDtypeStruct((B, C, 1), jnp.float32),
        grid_spec=pltpu.PrefetchScalarGridSpec(
            num_scalar_prefetch=0,
            grid=(B // bs_tile, n_hw),
            in_specs=[pl.BlockSpec((bs_tile, C, hw_tile), lambda b, h: (b, 0, h))],
            out_specs=pl.BlockSpec((bs_tile, C, 1), lambda b, h: (b, 0, 0)),
            scratch_shapes=[pltpu.VMEM((bs_tile, C, 1), jnp.float32)],
        ),
        compiler_params=pltpu.CompilerParams(
            dimension_semantics=("parallel", "arbitrary")),
    )(x_flat)

    # ---- pass 2: excite MLP on all B means at once (tiny, single block).
    sums2d = sums.reshape(B, C)
    gate2d = pl.pallas_call(
        functools.partial(_gate_kernel, inv_hw=1.0 / float(HW)),
        out_shape=jax.ShapeDtypeStruct((B, C), x.dtype),
    )(sums2d, w1.T, w2.T)
    gate3 = gate2d.reshape(B, C, 1)  # per-channel gate, lane dim = 1

    # ---- pass 3: scale, fully parallel tiling over (B, C, HW).
    c_tile = _divisor_tile(
        C, max(SUBLANE, _TARGET_BLOCK_BYTES // max(1, hw_tile * itemsize)), SUBLANE)
    b_tile = max(1, _TARGET_BLOCK_BYTES // max(1, c_tile * hw_tile * itemsize))
    b_tile = _divisor_tile(B, min(B, b_tile), 1)

    out_flat = pl.pallas_call(
        _scale_kernel,
        out_shape=jax.ShapeDtypeStruct((B, C, HW), x.dtype),
        grid_spec=pltpu.PrefetchScalarGridSpec(
            num_scalar_prefetch=0,
            grid=(B // b_tile, C // c_tile, n_hw),
            in_specs=[
                pl.BlockSpec((b_tile, c_tile, hw_tile), lambda b, c, h: (b, c, h)),
                pl.BlockSpec((b_tile, c_tile, 1), lambda b, c, h: (b, c, 0)),
            ],
            out_specs=pl.BlockSpec((b_tile, c_tile, hw_tile),
                                   lambda b, c, h: (b, c, h)),
        ),
        compiler_params=pltpu.CompilerParams(
            dimension_semantics=("parallel", "parallel", "parallel")),
    )(x_flat, gate3)

    return out_flat.reshape(B, C, H, W)


def se_layer_ref(x, w1, w2):
    """Pure-JAX reference matching the PyTorch module."""
    y = jnp.mean(x, axis=(2, 3))                   # (B, C)
    y = jnp.maximum(y @ w1.T, 0.0)                 # (B, C//r)
    y = jax.nn.sigmoid(y @ w2.T)                   # (B, C)
    return x * y[:, :, None, None]


if __name__ == "__main__":
    B, C, H, W = 2, 64, 16, 16
    reduction = 16
    hidden = C // reduction

    key = jax.random.PRNGKey(0)
    kx, k1, k2 = jax.random.split(key, 3)

    x = jax.random.normal(kx, (B, C, H, W), dtype=jnp.float32)
    # torch.nn.Linear(channel, channel//reduction, bias=False).weight -> (C//r, C)
    w1 = jax.random.normal(k1, (hidden, C), dtype=jnp.float32) * 0.1
    # torch.nn.Linear(channel//reduction, channel, bias=False).weight -> (C, C//r)
    w2 = jax.random.normal(k2, (C, hidden), dtype=jnp.float32) * 0.1

    out = se_layer(x, w1, w2)
    jax.block_until_ready(out)

    ref = se_layer_ref(x, w1, w2)
    assert out.shape == (B, C, H, W)
    # Tolerance covers possible MXU precision differences vs XLA's default matmul.
    assert jnp.allclose(out, ref, atol=2e-3, rtol=2e-3), "mismatch vs reference"

    print("KERNEL_OK")
</pallas_src>

<mosaic_0001>
module attributes {stable_mosaic.version = 11 : i64} {
  func.func @_squeeze_kernel(%arg0: i32, %arg1: i32, %arg2: memref<2x64x256xf32, #tpu.memory_space<vmem>>, %arg3: memref<2x64x1xf32, #tpu.memory_space<vmem>>, %arg4: memref<2x64x1xf32, #tpu.memory_space<vmem>>) attributes {dimension_semantics = [#tpu.dimension_semantics<parallel>, #tpu.dimension_semantics<arbitrary>], iteration_bounds = array<i64: 1, 1>, scalar_prefetch = 0 : i64, scratch_operands = 1 : i64, tpu.core_type = #tpu.core_type<tc>, window_params = [{transform_indices = @transform_0, window_bounds = array<i64: 2, 64, 256>}, {transform_indices = @transform_1, window_bounds = array<i64: 2, 64, 1>}]} {
    %c0_i32 = arith.constant 0 : i32
    %0 = arith.cmpi eq, %arg1, %c0_i32 : i32
    %1 = arith.extui %0 : i1 to i32
    %c0_i32_0 = arith.constant 0 : i32
    %2 = arith.cmpi ne, %1, %c0_i32_0 : i32
    scf.if %2 {
      %cst_11 = arith.constant 0.000000e+00 : f32
      %12 = vector.broadcast %cst_11 : f32 to vector<2x64x1xf32>
      %c0_12 = arith.constant 0 : index
      %c0_13 = arith.constant 0 : index
      %c0_14 = arith.constant 0 : index
      %13 = vector.load %arg4[%c0_12, %c0_13, %c0_14] : memref<2x64x1xf32, #tpu.memory_space<vmem>>, vector<2x64x1xf32>
      tpu.vector_store %arg4[%c0_12, %c0_13, %c0_14], %12 {strides = array<i32>} : memref<2x64x1xf32, #tpu.memory_space<vmem>>, vector<2x64x1xf32>,
    } else {
    }
    %c0 = arith.constant 0 : index
    %c0_1 = arith.constant 0 : index
    %c0_2 = arith.constant 0 : index
    %3 = vector.load %arg2[%c0, %c0_1, %c0_2] : memref<2x64x256xf32, #tpu.memory_space<vmem>>, vector<2x64x256xf32>
    %c0_3 = arith.constant 0 : index
    %c0_4 = arith.constant 0 : index
    %c0_5 = arith.constant 0 : index
    %4 = vector.load %arg4[%c0_3, %c0_4, %c0_5] : memref<2x64x1xf32, #tpu.memory_space<vmem>>, vector<2x64x1xf32>
    %cst = arith.constant dense<0.000000e+00> : vector<2x64xf32>
    %5 = vector.multi_reduction <add>, %3, %cst [2] : vector<2x64x256xf32> to vector<2x64xf32>
    %6 = vector.shape_cast %5 : vector<2x64xf32> to vector<2x64x1xf32>
    %7 = arith.addf %4, %6 : vector<2x64x1xf32>
    %c0_6 = arith.constant 0 : index
    %c0_7 = arith.constant 0 : index
    %c0_8 = arith.constant 0 : index
    %8 = vector.load %arg4[%c0_6, %c0_7, %c0_8] : memref<2x64x1xf32, #tpu.memory_space<vmem>>, vector<2x64x1xf32>
    tpu.vector_store %arg4[%c0_6, %c0_7, %c0_8], %7 {strides = array<i32>} : memref<2x64x1xf32, #tpu.memory_space<vmem>>, vector<2x64x1xf32>,
    %c0_i32_9 = arith.constant 0 : i32
    %9 = arith.cmpi eq, %arg1, %c0_i32_9 : i32
    %10 = arith.extui %9 : i1 to i32
    %c0_i32_10 = arith.constant 0 : i32
    %11 = arith.cmpi ne, %10, %c0_i32_10 : i32
    scf.if %11 {
      %c0_11 = arith.constant 0 : index
      %c0_12 = arith.constant 0 : index
      %c0_13 = arith.constant 0 : index
      %12 = vector.load %arg4[%c0_11, %c0_12, %c0_13] : memref<2x64x1xf32, #tpu.memory_space<vmem>>, vector<2x64x1xf32>
      %c0_14 = arith.constant 0 : index
      %c0_15 = arith.constant 0 : index
      %c0_16 = arith.constant 0 : index
      %13 = vector.load %arg3[%c0_14, %c0_15, %c0_16] : memref<2x64x1xf32, #tpu.memory_space<vmem>>, vector<2x64x1xf32>
      tpu.vector_store %arg3[%c0_14, %c0_15, %c0_16], %12 {strides = array<i32>} : memref<2x64x1xf32, #tpu.memory_space<vmem>>, vector<2x64x1xf32>,
    } else {
    }
    return
  }
  func.func @transform_0(%arg0: i32, %arg1: i32) -> (i32, i32, i32) {
    %c0_i32 = arith.constant 0 : i32
    %c0_i32_0 = arith.constant 0 : i32
    return %arg0, %c0_i32, %arg1 : i32, i32, i32
  }
  func.func @transform_1(%arg0: i32, %arg1: i32) -> (i32, i32, i32) {
    %c0_i32 = arith.constant 0 : i32
    %c0_i32_0 = arith.constant 0 : i32
    %c0_i32_1 = arith.constant 0 : i32
    return %arg0, %c0_i32, %c0_i32_0 : i32, i32, i32
  }
}

</mosaic_0001>

<llo_original>
// kernel: tpu_custom_call.1
$region0: #{tpu_custom_call.1}
  #allocation0 [shape = 'u32[]', space=smem, size = 0x4, offset = 0x4, fixed_abs, tag = 'smem constant byte address 0x4 - core index']
  #allocation1 [shape = 'u32[144,128]{1,0:T(1,128)}', space=vmem, size = 0x12000, scoped, tag = 'internal scratch']
  #allocation2 [shape = 'f32[2,64,1]{2,1,0:T(8,128)}', space=vmem, size = 0x10000, scoped, tag = 'scratch operand']
  %s0 = inlined_call_operand.hbm [shape: f32[2,64,256], index: 0, kind: input, shape index: {}]
  %s1 = inlined_call_operand.vmem [shape: f32[2,64,1], index: 1, kind: output, shape index: {}]
  %s2 = sld [smem:[#allocation0]]
  $region26: #{tpu_custom_call.1} parent=0
    _
  %s4 = ssub.s32 1, %s2
  %s5 = scalar_select 0, %s4, %s2
  $region1: #{tpu_custom_call.1} parent=0
    #allocation3 [shape = 'u8[131072]{0}', space=vmem, size = 0x20000, scoped, tag = 'input window, operand 0, single buffered']
    #allocation4 [shape = 's32[1]{0}', space=sflag, size = 0x4, scoped, tag = 'scoped memory for tpu_custom_call.1']
    %6 = vsyncpa [#allocation4], 0
    // Predicated region
    $region2: #{tpu_custom_call.1} parent=1 // pred_check
      _
    $region3: #{tpu_custom_call.1} parent=1 // pred_check_branch
      %8 = sbr.rel (0) target = $region5
    $region4: #{tpu_custom_call.1} parent=1 // pred_region
      %s10 = ssub.s32 4096, 4096
      %11 = vsyncadd [#allocation4], %s10
      %s12 = sshll.u32 [#allocation3], 4
      %s13 = int_to_ptr.vmem [resolvable:$true] %s12
      %18 = dma.hbm_to_vmem [thread:$0]  %s0, 4096, %s13, [#allocation4], 256, 256, 16
    $region5: #{tpu_custom_call.1} parent=1 // pred_fallthru
      _
    // Predicated region
    $region6: #{tpu_custom_call.1} parent=1 // pred_check
      _
    $region7: #{tpu_custom_call.1} parent=1 // pred_check_branch
      %20 = sbr.rel (0) target = $region9
    $region8: #{tpu_custom_call.1} parent=1 // pred_region
      %21 = dma.done [#allocation4], 4096
    $region9: #{tpu_custom_call.1} parent=1 // pred_fallthru
      _
    %p22 = scmp.eq.s32.totalorder 0, 0
    // Predicated region
    $region10: #{tpu_custom_call.1} parent=1 // pred_check
      %p23 = pneg %p22
    $region11: #{tpu_custom_call.1} parent=1 // pred_check_branch
      %25 = sbr.rel (%p23) target = $region13
    $region12: #{tpu_custom_call.1} parent=1 // pred_region
      %vm26 = vcmask 7168
      %27 = vst.msk [vmem:[#allocation2] sm:$0xff] %vm26, 0.0
      %28 = vst.msk [vmem:[#allocation2 + $0x8] sm:$0xff] %vm26, 0.0
      %29 = vst.msk [vmem:[#allocation2 + $0x10] sm:$0xff] %vm26, 0.0
      %30 = vst.msk [vmem:[#allocation2 + $0x18] sm:$0xff] %vm26, 0.0
      %31 = vst.msk [vmem:[#allocation2 + $0x20] sm:$0xff] %vm26, 0.0
      %32 = vst.msk [vmem:[#allocation2 + $0x28] sm:$0xff] %vm26, 0.0
      %33 = vst.msk [vmem:[#allocation2 + $0x30] sm:$0xff] %vm26, 0.0
      %34 = vst.msk [vmem:[#allocation2 + $0x38] sm:$0xff] %vm26, 0.0
      %35 = vst.msk [vmem:[#allocation2 + $0x40] sm:$0xff] %vm26, 0.0
      %36 = vst.msk [vmem:[#allocation2 + $0x48] sm:$0xff] %vm26, 0.0
      %37 = vst.msk [vmem:[#allocation2 + $0x50] sm:$0xff] %vm26, 0.0
      %38 = vst.msk [vmem:[#allocation2 + $0x58] sm:$0xff] %vm26, 0.0
      %39 = vst.msk [vmem:[#allocation2 + $0x60] sm:$0xff] %vm26, 0.0
      %40 = vst.msk [vmem:[#allocation2 + $0x68] sm:$0xff] %vm26, 0.0
      %41 = vst.msk [vmem:[#allocation2 + $0x70] sm:$0xff] %vm26, 0.0
      %42 = vst.msk [vmem:[#allocation2 + $0x78] sm:$0xff] %vm26, 0.0
    $region13: #{tpu_custom_call.1} parent=1 // pred_fallthru
      _
    %v43 = vld [vmem:[#allocation3] sm:$0xff]
    %v44 = vld [vmem:[#allocation3 + $0x8] sm:$0xff]
    %v45 = vld [vmem:[#allocation3 + $0x10] sm:$0xff]
    %v46 = vld [vmem:[#allocation3 + $0x18] sm:$0xff]
    %v47 = vld [vmem:[#allocation3 + $0x20] sm:$0xff]
    %v48 = vld [vmem:[#allocation3 + $0x28] sm:$0xff]
    %v49 = vld [vmem:[#allocation3 + $0x30] sm:$0xff]
    %v50 = vld [vmem:[#allocation3 + $0x38] sm:$0xff]
    %v51 = vld [vmem:[#allocation3 + $0x40] sm:$0xff]
    %v52 = vld [vmem:[#allocation3 + $0x48] sm:$0xff]
    %v53 = vld [vmem:[#allocation3 + $0x50] sm:$0xff]
    %v54 = vld [vmem:[#allocation3 + $0x58] sm:$0xff]
    %v55 = vld [vmem:[#allocation3 + $0x60] sm:$0xff]
    %v56 = vld [vmem:[#allocation3 + $0x68] sm:$0xff]
    %v57 = vld [vmem:[#allocation3 + $0x70] sm:$0xff]
    %v58 = vld [vmem:[#allocation3 + $0x78] sm:$0xff]
    %v59 = vld [vmem:[#allocation3 + $0x80] sm:$0xff]
    %v60 = vld [vmem:[#allocation3 + $0x88] sm:$0xff]
    %v61 = vld [vmem:[#allocation3 + $0x90] sm:$0xff]
    %v62 = vld [vmem:[#allocation3 + $0x98] sm:$0xff]
    %v63 = vld [vmem:[#allocation3 + $0xa0] sm:$0xff]
    %v64 = vld [vmem:[#allocation3 + $0xa8] sm:$0xff]
    %v65 = vld [vmem:[#allocation3 + $0xb0] sm:$0xff]
    %v66 = vld [vmem:[#allocation3 + $0xb8] sm:$0xff]
    %v67 = vld [vmem:[#allocation3 + $0xc0] sm:$0xff]
    %v68 = vld [vmem:[#allocation3 + $0xc8] sm:$0xff]
    %v69 = vld [vmem:[#allocation3 + $0xd0] sm:$0xff]
    %v70 = vld [vmem:[#allocation3 + $0xd8] sm:$0xff]
    %v71 = vld [vmem:[#allocation3 + $0xe0] sm:$0xff]
    %v72 = vld [vmem:[#allocation3 + $0xe8] sm:$0xff]
    %v73 = vld [vmem:[#allocation3 + $0xf0] sm:$0xff]
    %v74 = vld [vmem:[#allocation3 + $0xf8] sm:$0xff]
    %v75 = vld [vmem:[#allocation2] sm:$0xff]
    %v76 = vld [vmem:[#allocation2 + $0x8] sm:$0xff]
    %v77 = vld [vmem:[#allocation2 + $0x10] sm:$0xff]
    %v78 = vld [vmem:[#allocation2 + $0x18] sm:$0xff]
    %v79 = vld [vmem:[#allocation2 + $0x20] sm:$0xff]
    %v80 = vld [vmem:[#allocation2 + $0x28] sm:$0xff]
    %v81 = vld [vmem:[#allocation2 + $0x30] sm:$0xff]
    %v82 = vld [vmem:[#allocation2 + $0x38] sm:$0xff]
    %v83 = vld [vmem:[#allocation2 + $0x40] sm:$0xff]
    %v84 = vld [vmem:[#allocation2 + $0x48] sm:$0xff]
    %v85 = vld [vmem:[#allocation2 + $0x50] sm:$0xff]
    %v86 = vld [vmem:[#allocation2 + $0x58] sm:$0xff]
    %v87 = vld [vmem:[#allocation2 + $0x60] sm:$0xff]
    %v88 = vld [vmem:[#allocation2 + $0x68] sm:$0xff]
    %v89 = vld [vmem:[#allocation2 + $0x70] sm:$0xff]
    %v90 = vld [vmem:[#allocation2 + $0x78] sm:$0xff]
    %v91 = vadd.f32 %v43, %v44
    %92 = vadd.xlane.f32.xlu0 %v91
    %v93 = vpop.xlane.xlu0 %92
    %v94 = vadd.f32 %v45, %v46
    %95 = vadd.xlane.f32.xlu0 %v94
    %v96 = vpop.xlane.xlu0 %95
    %v97 = vadd.f32 %v47, %v48
    %98 = vadd.xlane.f32.xlu0 %v97
    %v99 = vpop.xlane.xlu0 %98
    %v100 = vadd.f32 %v49, %v50
    %101 = vadd.xlane.f32.xlu0 %v100
    %v102 = vpop.xlane.xlu0 %101
    %v103 = vadd.f32 %v51, %v52
    %104 = vadd.xlane.f32.xlu0 %v103
    %v105 = vpop.xlane.xlu0 %104
    %v106 = vadd.f32 %v53, %v54
    %107 = vadd.xlane.f32.xlu0 %v106
    %v108 = vpop.xlane.xlu0 %107
    %v109 = vadd.f32 %v55, %v56
    %110 = vadd.xlane.f32.xlu0 %v109
    %v111 = vpop.xlane.xlu0 %110
    %v112 = vadd.f32 %v57, %v58
    %113 = vadd.xlane.f32.xlu0 %v112
    %v114 = vpop.xlane.xlu0 %113
    %v115 = vadd.f32 %v59, %v60
    %116 = vadd.xlane.f32.xlu0 %v115
    %v117 = vpop.xlane.xlu0 %116
    %v118 = vadd.f32 %v61, %v62
    %119 = vadd.xlane.f32.xlu0 %v118
    %v120 = vpop.xlane.xlu0 %119
    %v121 = vadd.f32 %v63, %v64
    %122 = vadd.xlane.f32.xlu0 %v121
    %v123 = vpop.xlane.xlu0 %122
    %v124 = vadd.f32 %v65, %v66
    %125 = vadd.xlane.f32.xlu0 %v124
    %v126 = vpop.xlane.xlu0 %125
    %v127 = vadd.f32 %v67, %v68
    %128 = vadd.xlane.f32.xlu0 %v127
    %v129 = vpop.xlane.xlu0 %128
    %v130 = vadd.f32 %v69, %v70
    %131 = vadd.xlane.f32.xlu0 %v130
    %v132 = vpop.xlane.xlu0 %131
    %v133 = vadd.f32 %v71, %v72
    %134 = vadd.xlane.f32.xlu0 %v133
    %v135 = vpop.xlane.xlu0 %134
    %v136 = vadd.f32 %v73, %v74
    %137 = vadd.xlane.f32.xlu0 %v136
    %v138 = vpop.xlane.xlu0 %137
    %v139 = vadd.f32 %v75, %v93
    %v140 = vadd.f32 %v76, %v96
    %v141 = vadd.f32 %v77, %v99
    %v142 = vadd.f32 %v78, %v102
    %v143 = vadd.f32 %v79, %v105
    %v144 = vadd.f32 %v80, %v108
    %v145 = vadd.f32 %v81, %v111
    %v146 = vadd.f32 %v82, %v114
    %v147 = vadd.f32 %v83, %v117
    %v148 = vadd.f32 %v84, %v120
    %v149 = vadd.f32 %v85, %v123
    %v150 = vadd.f32 %v86, %v126
    %v151 = vadd.f32 %v87, %v129
    %v152 = vadd.f32 %v88, %v132
    %v153 = vadd.f32 %v89, %v135
    %v154 = vadd.f32 %v90, %v138
    %vm155 = vcmask 7168
    %156 = vst.msk [vmem:[#allocation2] sm:$0xff] %vm155, %v139
    %157 = vst.msk [vmem:[#allocation2 + $0x8] sm:$0xff] %vm155, %v140
    %158 = vst.msk [vmem:[#allocation2 + $0x10] sm:$0xff] %vm155, %v141
    %159 = vst.msk [vmem:[#allocation2 + $0x18] sm:$0xff] %vm155, %v142
    %160 = vst.msk [vmem:[#allocation2 + $0x20] sm:$0xff] %vm155, %v143
    %161 = vst.msk [vmem:[#allocation2 + $0x28] sm:$0xff] %vm155, %v144
    %162 = vst.msk [vmem:[#allocation2 + $0x30] sm:$0xff] %vm155, %v145
    %163 = vst.msk [vmem:[#allocation2 + $0x38] sm:$0xff] %vm155, %v146
    %164 = vst.msk [vmem:[#allocation2 + $0x40] sm:$0xff] %vm155, %v147
    %165 = vst.msk [vmem:[#allocation2 + $0x48] sm:$0xff] %vm155, %v148
    %166 = vst.msk [vmem:[#allocation2 + $0x50] sm:$0xff] %vm155, %v149
    %167 = vst.msk [vmem:[#allocation2 + $0x58] sm:$0xff] %vm155, %v150
    %168 = vst.msk [vmem:[#allocation2 + $0x60] sm:$0xff] %vm155, %v151
    %169 = vst.msk [vmem:[#allocation2 + $0x68] sm:$0xff] %vm155, %v152
    %170 = vst.msk [vmem:[#allocation2 + $0x70] sm:$0xff] %vm155, %v153
    %171 = vst.msk [vmem:[#allocation2 + $0x78] sm:$0xff] %vm155, %v154
    // Predicated region
    $region14: #{tpu_custom_call.1} parent=1 // pred_check
      %p172 = pneg %p22
    $region15: #{tpu_custom_call.1} parent=1 // pred_check_branch
      %174 = sbr.rel (%p172) target = $region17
    $region16: #{tpu_custom_call.1} parent=1 // pred_region
      %v175 = vld [vmem:[#allocation2] sm:$0xff]
      %v176 = vld [vmem:[#allocation2 + $0x8] sm:$0xff]
      %v177 = vld [vmem:[#allocation2 + $0x10] sm:$0xff]
      %v178 = vld [vmem:[#allocation2 + $0x18] sm:$0xff]
      %v179 = vld [vmem:[#allocation2 + $0x20] sm:$0xff]
      %v180 = vld [vmem:[#allocation2 + $0x28] sm:$0xff]
      %v181 = vld [vmem:[#allocation2 + $0x30] sm:$0xff]
      %v182 = vld [vmem:[#allocation2 + $0x38] sm:$0xff]
      %v183 = vld [vmem:[#allocation2 + $0x40] sm:$0xff]
      %v184 = vld [vmem:[#allocation2 + $0x48] sm:$0xff]
      %v185 = vld [vmem:[#allocation2 + $0x50] sm:$0xff]
      %v186 = vld [vmem:[#allocation2 + $0x58] sm:$0xff]
      %v187 = vld [vmem:[#allocation2 + $0x60] sm:$0xff]
      %v188 = vld [vmem:[#allocation2 + $0x68] sm:$0xff]
      %v189 = vld [vmem:[#allocation2 + $0x70] sm:$0xff]
      %v190 = vld [vmem:[#allocation2 + $0x78] sm:$0xff]
      %191 = vst.msk [vmem:[%s1] sm:$0xff] %vm155, %v175
      %192 = vst.msk [vmem:[%s1 + $0x8] sm:$0xff] %vm155, %v176
      %193 = vst.msk [vmem:[%s1 + $0x10] sm:$0xff] %vm155, %v177
      %194 = vst.msk [vmem:[%s1 + $0x18] sm:$0xff] %vm155, %v178
      %195 = vst.msk [vmem:[%s1 + $0x20] sm:$0xff] %vm155, %v179
      %196 = vst.msk [vmem:[%s1 + $0x28] sm:$0xff] %vm155, %v180
      %197 = vst.msk [vmem:[%s1 + $0x30] sm:$0xff] %vm155, %v181
      %198 = vst.msk [vmem:[%s1 + $0x38] sm:$0xff] %vm155, %v182
      %199 = vst.msk [vmem:[%s1 + $0x40] sm:$0xff] %vm155, %v183
      %200 = vst.msk [vmem:[%s1 + $0x48] sm:$0xff] %vm155, %v184
      %201 = vst.msk [vmem:[%s1 + $0x50] sm:$0xff] %vm155, %v185
      %202 = vst.msk [vmem:[%s1 + $0x58] sm:$0xff] %vm155, %v186
      %203 = vst.msk [vmem:[%s1 + $0x60] sm:$0xff] %vm155, %v187
      %204 = vst.msk [vmem:[%s1 + $0x68] sm:$0xff] %vm155, %v188
      %205 = vst.msk [vmem:[%s1 + $0x70] sm:$0xff] %vm155, %v189
      %206 = vst.msk [vmem:[%s1 + $0x78] sm:$0xff] %vm155, %v190
    $region17: #{tpu_custom_call.1} parent=1 // pred_fallthru
      _
    // Predicated region
    $region18: #{tpu_custom_call.1} parent=1 // pred_check
      _
    $region19: #{tpu_custom_call.1} parent=1 // pred_check_branch
      %208 = sbr.rel (0) target = $region21
    $region20: #{tpu_custom_call.1} parent=1 // pred_region
      _
    $region21: #{tpu_custom_call.1} parent=1 // pred_fallthru
      _
    // Predicated region
    $region22: #{tpu_custom_call.1} parent=1 // pred_check
      _
    $region23: #{tpu_custom_call.1} parent=1 // pred_check_branch
      %210 = sbr.rel (0) target = $region25
    $region24: #{tpu_custom_call.1} parent=1 // pred_region
      _
    $region25: #{tpu_custom_call.1} parent=1 // pred_fallthru
      _
    %211 = vsyncpa [#allocation4], 1

</llo_original>
